<compile_context>
chip_gen: v7x
topology: tpu7x:2x2x1
jax: 0.10.0
libtpu: 0.0.40
codegen_flags: <defaults>
</compile_context>

<pallas_src>
import functools

import jax
import jax.numpy as jnp
from jax.experimental import pallas as pl
from jax.experimental.pallas import tpu as pltpu


# Head layout (name, cout, apply_sigmoid) -- order fixes the row layout of the
# fused second-matmul weight and the channel layout of the fused output.
HEAD_SPECS = (
    ("binary_seg", 2, True),
    ("binary_seg1", 2, True),
    ("haf", 1, False),
    ("vaf", 2, False),
    ("offset", 2, True),
    ("z", 1, False),
)

COUT_PAD = 16  # 10 real output rows padded to a sublane-aligned 16


def _round_up(x, m):
    return (x + m - 1) // m * m


def _sigmoid_row_mask(shape):
    """Boolean (rows, pixels) mask of which fused-output rows get a sigmoid."""
    row = jax.lax.broadcasted_iota(jnp.int32, shape, 0)
    conds = []
    r = 0
    for _, cout, sig in HEAD_SPECS:
        if sig:
            conds.append((row >= r) & (row < r + cout))
        r += cout
    return functools.reduce(jnp.logical_or, conds)


# ----------------------------- Pallas kernel ------------------------------ #
def _fused_head_kernel(x_ref, w1_ref, b1_ref, w2_ref, b2_ref, o_ref):
    # x_ref:  (1, Cin, TILE_P)        f32 pixel tile (channel-major)
    # w1_ref: (Cmid_total, Cin)       bf16, all six BN-folded conv1 weights
    # b1_ref: (Cmid_total, 1)         f32, BN-folded conv1 biases
    # w2_ref: (COUT_PAD, Cmid_total)  bf16, block-diagonal conv2 weights (zero-padded rows)
    # b2_ref: (COUT_PAD, 1)           f32 conv2 biases (zero-padded rows)
    # o_ref:  (1, COUT_PAD, TILE_P)   f32 fused output (single lane-dense store)
    x = x_ref[0].astype(jnp.bfloat16)                                  # cheap VPU cast
    h = jnp.dot(w1_ref[...], x, preferred_element_type=jnp.float32)   # (Cmid, TP) f32
    h = jnp.maximum(h + b1_ref[...], 0.0).astype(jnp.bfloat16)        # bias+ReLU -> bf16
    y = jnp.dot(w2_ref[...], h, preferred_element_type=jnp.float32)   # (16, TP) f32
    y = y + b2_ref[...]
    y = jnp.where(_sigmoid_row_mask(y.shape), jax.nn.sigmoid(y), y)
    o_ref[0] = y.astype(o_ref.dtype)


# ------------------------------ forward pass ------------------------------- #
def bev_lane_head_forward(topdown, fused_params, *, max_tile_p=4096):
    """topdown: (B, C, H, W) float32 (NCHW, like the PyTorch module)."""
    B, C, H, W = topdown.shape
    P = H * W
    w1cat, b1cat, w2blk, b2cat = fused_params
    cmid_total = w1cat.shape[0]
    cout_pad = w2blk.shape[0]

    # Lane-dense pixel tile (multiple of 128); ragged last tile handled by Pallas.
    tp = min(max_tile_p, _round_up(P, 128))
    grid = (B, pl.cdiv(P, tp))

    # NCHW -> (B, C, H*W) is a free reshape; input stays f32 in HBM (read once).
    x = topdown.reshape(B, C, P)

    out = pl.pallas_call(
        _fused_head_kernel,
        out_shape=jax.ShapeDtypeStruct((B, cout_pad, P), jnp.float32),
        grid_spec=pltpu.PrefetchScalarGridSpec(
            num_scalar_prefetch=0,
            grid=grid,
            in_specs=[
                pl.BlockSpec((1, C, tp), lambda b, p: (b, 0, p)),             # x tile
                pl.BlockSpec((cmid_total, C), lambda b, p: (0, 0)),           # W1cat
                pl.BlockSpec((cmid_total, 1), lambda b, p: (0, 0)),           # b1cat
                pl.BlockSpec((cout_pad, cmid_total), lambda b, p: (0, 0)),    # W2 blkdiag
                pl.BlockSpec((cout_pad, 1), lambda b, p: (0, 0)),             # b2cat
            ],
            out_specs=pl.BlockSpec((1, cout_pad, tp), lambda b, p: (b, 0, p)),
        ),
        compiler_params=pltpu.CompilerParams(
            dimension_semantics=("parallel", "parallel"),
            vmem_limit_bytes=48 * 1024 * 1024),
    )(x, w1cat, b1cat, w2blk, b2cat)

    # Split the fused 16-row output into the six heads (cheap channel slices).
    results = {}
    row = 0
    for name, cout, _ in HEAD_SPECS:
        results[name] = out[:, row:row + cout, :].reshape(B, cout, H, W)
        row += cout

    embedding = None  # never computed in the reference forward()
    return (results["binary_seg"], results["binary_seg1"], embedding,
            results["haf"], results["vaf"], results["offset"],
            results["z"], topdown)


# --------------------------- parameter creation ---------------------------- #
def make_head_params(key, cin, cmid, cout):
    """Per-head params with BN (eval mode) folded into conv1.

    Layouts match the fused kernel orientation:
      w1_f: (cmid, cin)  so that h = w1_f @ x
      w2  : (cout, cmid) so that y = w2 @ h
    """
    k = jax.random.split(key, 8)
    eps = 1e-5
    w1 = 0.1 * jax.random.normal(k[0], (cmid, cin), jnp.float32)
    b1 = 0.1 * jax.random.normal(k[1], (cmid,), jnp.float32)
    gamma = 1.0 + 0.1 * jax.random.normal(k[2], (cmid,), jnp.float32)
    beta = 0.1 * jax.random.normal(k[3], (cmid,), jnp.float32)
    run_mean = 0.1 * jax.random.normal(k[4], (cmid,), jnp.float32)
    run_var = 1.0 + 0.1 * jnp.abs(jax.random.normal(k[5], (cmid,), jnp.float32))
    scale = gamma / jnp.sqrt(run_var + eps)
    w1_f = w1 * scale[:, None]
    b1_f = (b1 - run_mean) * scale + beta
    w2 = 0.1 * jax.random.normal(k[6], (cout, cmid), jnp.float32)
    b2 = 0.1 * jax.random.normal(k[7], (cout,), jnp.float32)
    return w1_f, b1_f, w2, b2


def make_bevlanehead_params(key, in_channel=64, inner_channel=64):
    keys = jax.random.split(key, len(HEAD_SPECS))
    per_head = {}
    for k, (name, cout, _) in zip(keys, HEAD_SPECS):
        per_head[name] = make_head_params(k, in_channel, inner_channel, cout)
    return per_head


def fuse_bevlanehead_params(per_head, in_channel=64, inner_channel=64,
                            cout_pad=COUT_PAD):
    """Build fused (W1cat bf16, b1cat f32, W2 block-diag bf16, b2cat f32)."""
    n = len(HEAD_SPECS)
    cmid_total = n * inner_channel
    cout_total = sum(c for _, c, _ in HEAD_SPECS)
    assert cout_pad >= cout_total

    w1cat = jnp.concatenate([per_head[name][0] for name, _, _ in HEAD_SPECS], axis=0)
    b1cat = jnp.concatenate([per_head[name][1] for name, _, _ in HEAD_SPECS], axis=0)
    w2blk = jnp.zeros((cout_pad, cmid_total), jnp.float32)
    b2cat = jnp.zeros((cout_pad,), jnp.float32)
    row = 0
    for i, (name, cout, _) in enumerate(HEAD_SPECS):
        w2 = per_head[name][2]
        b2 = per_head[name][3]
        w2blk = w2blk.at[row:row + cout,
                         i * inner_channel:(i + 1) * inner_channel].set(w2)
        b2cat = b2cat.at[row:row + cout].set(b2)
        row += cout

    return (w1cat.astype(jnp.bfloat16),           # bf16 MXU operand
            b1cat.reshape(cmid_total, 1).astype(jnp.float32),
            w2blk.astype(jnp.bfloat16),           # bf16 MXU operand (fewer passes)
            b2cat.reshape(cout_pad, 1))


# --------------------------- pure-JAX reference ---------------------------- #
def _ref_head(x_bf_f32, w1_f, b1_f, w2, b2, sig):
    """Mirror the kernel's rounding: bf16 operands everywhere, f32 accumulate.

    x_bf_f32: (B, Cin, P) already bf16-rounded & upcast to f32.
    """
    w1b = w1_f.astype(jnp.bfloat16).astype(jnp.float32)
    h = jnp.maximum(jnp.einsum("mc,bcp->bmp", w1b, x_bf_f32) + b1_f[None, :, None], 0.0)
    h = h.astype(jnp.bfloat16).astype(jnp.float32)
    w2b = w2.astype(jnp.bfloat16).astype(jnp.float32)
    y = jnp.einsum("om,bmp->bop", w2b, h) + b2[None, :, None]
    return jax.nn.sigmoid(y) if sig else y


def _check_outputs(out, topdown, per_head, atol=1e-3, rtol=1e-3):
    B, C, H, W = topdown.shape
    P = H * W
    x_ref = topdown.reshape(B, C, P).astype(jnp.bfloat16).astype(jnp.float32)
    for idx, (name, cout, sig) in zip([0, 1, 3, 4, 5, 6], HEAD_SPECS):
        w1_f, b1_f, w2, b2 = per_head[name]
        ref = _ref_head(x_ref, w1_f, b1_f, w2, b2, sig).reshape(B, cout, H, W)
        assert out[idx].shape == (B, cout, H, W), name
        assert jnp.allclose(out[idx], ref, atol=atol, rtol=rtol), name
    assert out[2] is None                 # embedding is None in forward()
    assert out[7].shape == (B, C, H, W)   # topdown passthrough


if __name__ == "__main__":
    key = jax.random.PRNGKey(0)
    k_in, k_in2, k_par = jax.random.split(key, 3)

    # in_channel must be 64 (module default); keep spatial small for the test.
    B, C, H, W = 2, 64, 16, 16
    topdown = jax.random.normal(k_in, (B, C, H, W), jnp.float32)

    per_head = make_bevlanehead_params(k_par, in_channel=C)
    fused = fuse_bevlanehead_params(per_head, in_channel=C)

    # Main run: P divides the tile evenly.
    out = bev_lane_head_forward(topdown, fused)
    out = jax.block_until_ready(out)
    _check_outputs(out, topdown, per_head)

    # Ragged-tile run: P = 384 with a 256-pixel tile -> partial last block
    # (garbage lanes flow through sigmoid but their stores are dropped).
    H2, W2 = 16, 24
    topdown2 = jax.random.normal(k_in2, (B, C, H2, W2), jnp.float32)
    out2 = bev_lane_head_forward(topdown2, fused, max_tile_p=256)
    out2 = jax.block_until_ready(out2)
    _check_outputs(out2, topdown2, per_head)

    # TODO(synk): the `embedding` head exists in __init__ but is never invoked
    # in the reference forward(); it is intentionally not computed here.
    print("KERNEL_OK")
</pallas_src>

<mosaic_0001>
module attributes {stable_mosaic.version = 11 : i64} {
  func.func @_fused_head_kernel(%arg0: i32, %arg1: i32, %arg2: memref<1x64x256xf32, #tpu.memory_space<vmem>>, %arg3: memref<384x64xbf16, #tpu.memory_space<vmem>>, %arg4: memref<384x1xf32, #tpu.memory_space<vmem>>, %arg5: memref<16x384xbf16, #tpu.memory_space<vmem>>, %arg6: memref<16x1xf32, #tpu.memory_space<vmem>>, %arg7: memref<1x16x256xf32, #tpu.memory_space<vmem>>) attributes {dimension_semantics = [#tpu.dimension_semantics<parallel>, #tpu.dimension_semantics<parallel>], iteration_bounds = array<i64: 2, 1>, scalar_prefetch = 0 : i64, scratch_operands = 0 : i64, tpu.core_type = #tpu.core_type<tc>, window_params = [{transform_indices = @transform_0, window_bounds = array<i64: 1, 64, 256>}, {pipeline_mode = #tpu.pipeline_mode<synchronous>, transform_indices = @transform_1, window_bounds = array<i64: 384, 64>}, {pipeline_mode = #tpu.pipeline_mode<synchronous>, transform_indices = @transform_2, window_bounds = array<i64: 384, 1>}, {pipeline_mode = #tpu.pipeline_mode<synchronous>, transform_indices = @transform_3, window_bounds = array<i64: 16, 384>}, {pipeline_mode = #tpu.pipeline_mode<synchronous>, transform_indices = @transform_4, window_bounds = array<i64: 16, 1>}, {transform_indices = @transform_5, window_bounds = array<i64: 1, 16, 256>}]} {
    %c0 = arith.constant 0 : index
    %c0_0 = arith.constant 0 : index
    %c0_1 = arith.constant 0 : index
    %0 = vector.load %arg2[%c0, %c0_0, %c0_1] : memref<1x64x256xf32, #tpu.memory_space<vmem>>, vector<1x64x256xf32>
    %1 = vector.shape_cast %0 : vector<1x64x256xf32> to vector<64x256xf32>
    %2 = arith.truncf %1 : vector<64x256xf32> to vector<64x256xbf16>
    %c0_2 = arith.constant 0 : index
    %c0_3 = arith.constant 0 : index
    %3 = vector.load %arg3[%c0_2, %c0_3] : memref<384x64xbf16, #tpu.memory_space<vmem>>, vector<384x64xbf16>
    %cst = arith.constant dense<0.000000e+00> : vector<384x256xf32>
    %4 = tpu.matmul %3, %2, %cst {dimension_numbers = #tpu.dot_dimension_numbers<[1], [0], [0], [1], [0, 0, 1, 1], [], []>} : vector<384x64xbf16>, vector<64x256xbf16>, vector<384x256xf32> -> vector<384x256xf32>
    %c0_4 = arith.constant 0 : index
    %c0_5 = arith.constant 0 : index
    %5 = vector.load %arg4[%c0_4, %c0_5] : memref<384x1xf32, #tpu.memory_space<vmem>>, vector<384x1xf32>
    %6 = vector.broadcast %5 : vector<384x1xf32> to vector<384x256xf32>
    %7 = arith.addf %4, %6 : vector<384x256xf32>
    %cst_6 = arith.constant 0.000000e+00 : f32
    %8 = vector.broadcast %cst_6 : f32 to vector<384x256xf32>
    %9 = arith.maximumf %7, %8 : vector<384x256xf32>
    %10 = arith.truncf %9 : vector<384x256xf32> to vector<384x256xbf16>
    %c0_7 = arith.constant 0 : index
    %c0_8 = arith.constant 0 : index
    %11 = vector.load %arg5[%c0_7, %c0_8] : memref<16x384xbf16, #tpu.memory_space<vmem>>, vector<16x384xbf16>
    %cst_9 = arith.constant dense<0.000000e+00> : vector<16x256xf32>
    %12 = tpu.matmul %11, %10, %cst_9 {dimension_numbers = #tpu.dot_dimension_numbers<[1], [0], [0], [1], [0, 0, 1, 1], [], []>} : vector<16x384xbf16>, vector<384x256xbf16>, vector<16x256xf32> -> vector<16x256xf32>
    %c0_10 = arith.constant 0 : index
    %c0_11 = arith.constant 0 : index
    %13 = vector.load %arg6[%c0_10, %c0_11] : memref<16x1xf32, #tpu.memory_space<vmem>>, vector<16x1xf32>
    %14 = vector.broadcast %13 : vector<16x1xf32> to vector<16x256xf32>
    %15 = arith.addf %12, %14 : vector<16x256xf32>
    %16 = tpu.iota {dimensions = array<i32: 0>} : vector<16x256xi32>
    %c0_i32 = arith.constant 0 : i32
    %17 = vector.broadcast %c0_i32 : i32 to vector<16x256xi32>
    %18 = arith.cmpi sge, %16, %17 : vector<16x256xi32>
    %c2_i32 = arith.constant 2 : i32
    %19 = vector.broadcast %c2_i32 : i32 to vector<16x256xi32>
    %20 = arith.cmpi slt, %16, %19 : vector<16x256xi32>
    %21 = arith.andi %18, %20 : vector<16x256xi1>
    %c2_i32_12 = arith.constant 2 : i32
    %22 = vector.broadcast %c2_i32_12 : i32 to vector<16x256xi32>
    %23 = arith.cmpi sge, %16, %22 : vector<16x256xi32>
    %c4_i32 = arith.constant 4 : i32
    %24 = vector.broadcast %c4_i32 : i32 to vector<16x256xi32>
    %25 = arith.cmpi slt, %16, %24 : vector<16x256xi32>
    %26 = arith.andi %23, %25 : vector<16x256xi1>
    %c7_i32 = arith.constant 7 : i32
    %27 = vector.broadcast %c7_i32 : i32 to vector<16x256xi32>
    %28 = arith.cmpi sge, %16, %27 : vector<16x256xi32>
    %c9_i32 = arith.constant 9 : i32
    %29 = vector.broadcast %c9_i32 : i32 to vector<16x256xi32>
    %30 = arith.cmpi slt, %16, %29 : vector<16x256xi32>
    %31 = arith.andi %28, %30 : vector<16x256xi1>
    %32 = arith.ori %21, %26 : vector<16x256xi1>
    %33 = arith.ori %32, %31 : vector<16x256xi1>
    %34 = arith.negf %15 : vector<16x256xf32>
    %35 = math.exp %34 : vector<16x256xf32>
    %cst_13 = arith.constant 1.000000e+00 : f32
    %36 = vector.broadcast %cst_13 : f32 to vector<16x256xf32>
    %37 = arith.addf %36, %35 : vector<16x256xf32>
    %38 = arith.divf %36, %37 : vector<16x256xf32>
    %39 = arith.select %33, %38, %15 : vector<16x256xi1>, vector<16x256xf32>
    %c0_14 = arith.constant 0 : index
    %c0_15 = arith.constant 0 : index
    %c0_16 = arith.constant 0 : index
    %40 = vector.load %arg7[%c0_14, %c0_15, %c0_16] : memref<1x16x256xf32, #tpu.memory_space<vmem>>, vector<1x16x256xf32>
    %41 = vector.shape_cast %40 : vector<1x16x256xf32> to vector<16x256xf32>
    %42 = vector.shape_cast %39 : vector<16x256xf32> to vector<1x16x256xf32>
    tpu.vector_store %arg7[%c0_14, %c0_15, %c0_16], %42 {strides = array<i32>} : memref<1x16x256xf32, #tpu.memory_space<vmem>>, vector<1x16x256xf32>,
    return
  }
  func.func @transform_0(%arg0: i32, %arg1: i32) -> (i32, i32, i32) {
    %c0_i32 = arith.constant 0 : i32
    %c0_i32_0 = arith.constant 0 : i32
    return %arg0, %c0_i32, %arg1 : i32, i32, i32
  }
  func.func @transform_1(%arg0: i32, %arg1: i32) -> (i32, i32) {
    %c0_i32 = arith.constant 0 : i32
    %c0_i32_0 = arith.constant 0 : i32
    %c0_i32_1 = arith.constant 0 : i32
    return %c0_i32, %c0_i32_0 : i32, i32
  }
  func.func @transform_2(%arg0: i32, %arg1: i32) -> (i32, i32) {
    %c0_i32 = arith.constant 0 : i32
    %c0_i32_0 = arith.constant 0 : i32
    %c0_i32_1 = arith.constant 0 : i32
    return %c0_i32, %c0_i32_0 : i32, i32
  }
  func.func @transform_3(%arg0: i32, %arg1: i32) -> (i32, i32) {
    %c0_i32 = arith.constant 0 : i32
    %c0_i32_0 = arith.constant 0 : i32
    %c0_i32_1 = arith.constant 0 : i32
    return %c0_i32, %c0_i32_0 : i32, i32
  }
  func.func @transform_4(%arg0: i32, %arg1: i32) -> (i32, i32) {
    %c0_i32 = arith.constant 0 : i32
    %c0_i32_0 = arith.constant 0 : i32
    %c0_i32_1 = arith.constant 0 : i32
    return %c0_i32, %c0_i32_0 : i32, i32
  }
  func.func @transform_5(%arg0: i32, %arg1: i32) -> (i32, i32, i32) {
    %c0_i32 = arith.constant 0 : i32
    %c0_i32_0 = arith.constant 0 : i32
    return %arg0, %c0_i32, %arg1 : i32, i32, i32
  }
}

</mosaic_0001>

<llo_original>
// kernel: tpu_custom_call.1
$region0: #{tpu_custom_call.1}
  #allocation0 [shape = 'u32[]', space=smem, size = 0x4, offset = 0x4, fixed_abs, tag = 'smem constant byte address 0x4 - core index']
  #allocation1 [shape = 'u32[144,128]{1,0:T(1,128)}', space=vmem, size = 0x12000, scoped, tag = 'internal scratch']
  %s0 = inlined_call_operand.vmem [shape: f32[2,64,256], index: 0, kind: input, shape index: {}]
  %s1 = inlined_call_operand.vmem [shape: bf16[384,64], index: 1, kind: input, shape index: {}]
  %s2 = inlined_call_operand.vmem [shape: f32[384,1], index: 2, kind: input, shape index: {}]
  %s3 = inlined_call_operand.vmem [shape: bf16[16,384], index: 3, kind: input, shape index: {}]
  %s4 = inlined_call_operand.vmem [shape: f32[16,1], index: 4, kind: input, shape index: {}]
  %s5 = inlined_call_operand.hbm [shape: f32[2,16,256], index: 5, kind: output, shape index: {}]
  %s6 = sld [smem:[#allocation0]]
  $region53: #{tpu_custom_call.1} parent=0
    _
  %s8 = ssub.s32 1, %s6
  %s9 = scalar_select 0, %s8, %s6
  $region1: #{tpu_custom_call.1} parent=0
    #allocation2 [shape = 'u8[32768]{0}', space=vmem, size = 0x8000, scoped, tag = 'output window, operand 0']
    #allocation3 [shape = 's32[2]{0}', space=sflag, size = 0x8, scoped, tag = 'scoped memory for tpu_custom_call.1']
    %10 = vsyncpa [#allocation3], 0
    %s11 = scalar_lea.sflag [#allocation3], 1
    %12 = vsyncpa %s11, 0
    loop: start=0, step=1, limit=4
    $region2: #{tpu_custom_call.1} parent=1 // loop_pre_header
      _
    $region3: #{tpu_custom_call.1} parent=1 // loop_header
      %s14 = sphi 0, %s18
      %p15 = scmp.ge.s32.totalorder %s14, 4
      %s21 = sphi 0, %s33
      %s22 = sphi 0, %s29
      %s23 = sphi 0, %s21
      %s24 = sphi 0, %s22
      %s25 = sphi 0, %s23
      %s26 = sphi 0, %s24
      %s38 = sphi 0, %s40
      %s41 = sphi 0, %s38
      %s42 = sphi 0, %s41
      %s58 = sphi 0, %s42
      %s62 = sphi 0, %s62
      %s64 = sphi 0, %s62
      %s65 = sphi 0, %s64
      %s79 = sphi 0, %s65
      %s83 = sphi 0, %s83
      %s85 = sphi 0, %s83
      %s86 = sphi 0, %s85
      %s100 = sphi 0, %s86
      %s104 = sphi 0, %s104
      %s106 = sphi 0, %s104
      %s107 = sphi 0, %s106
      %s121 = sphi 0, %s107
      %s125 = sphi 0, %s125
      %s127 = sphi 0, %s125
      %s128 = sphi 0, %s127
      %s142 = sphi 0, %s128
      %s150 = sphi 0, %s152
      %s153 = sphi 0, %s150
      %s154 = sphi 0, %s153
      %s170 = sphi 0, %s154
    $region4: #{tpu_custom_call.1} parent=1 // loop_header_branch
      %17 = sbr.rel (%p15) target = $region8
    $region5: #{tpu_custom_call.1} parent=1 // loop_body
      %s19 = ssub.s32 %s14, 1
      %s20 = ssub.s32 %s14, 2
      %s27 = sadd.s32 1, %s22
      %p28 = scmp.ge.s32.totalorder %s27, 1
      %s29 = scalar_select %p28, 0, %s27
      %s30 = sadd.s32 1, %s21
      %s31 = scalar_select %p28, %s30, %s21
      %p32 = scmp.ge.s32.totalorder %s31, 2
      %s33 = scalar_select %p32, 0, %s31
      %s34 = ssub.s32 %s21, %s33
      %s35 = ssub.s32 %s22, %s29
      %s36 = sor.u32 %s34, %s35
      %p37 = scmp.eq.s32.totalorder %s36, 0
      %s39 = sadd.s32 %s38, 1
      %s40 = scalar_select %p37, %s38, %s39
      %p43 = pneg %p37
      %p44 = scmp.eq.s32.totalorder %s14, 1
      %p45 = por %p43, %p44
      %p46 = scmp.ne.s32.totalorder %s38, %s41
      %p47 = scmp.eq.s32.totalorder %s14, 0
      %p48 = por %p46, %p47
      %p49 = scmp.ne.s32.totalorder %s38, %s41
      %p50 = scmp.eq.s32.totalorder %s19, 1
      %p51 = por %p49, %p50
      %p52 = scmp.ne.s32.totalorder %s41, %s42
      %p53 = scmp.eq.s32.totalorder %s19, 0
      %p54 = por %p52, %p53
      %p55 = scmp.ne.s32.totalorder %s41, %s42
      %p56 = scmp.eq.s32.totalorder %s20, 1
      %p57 = por %p55, %p56
      %p59 = scmp.ne.s32.totalorder %s42, %s58
      %p60 = scmp.eq.s32.totalorder %s20, 0
      %p61 = por %p59, %p60
      %s63 = sadd.s32 %s62, 1
      %p66 = scmp.eq.s32.totalorder %s14, 1
      %p67 = scmp.ne.s32.totalorder %s62, %s64
      %p68 = scmp.eq.s32.totalorder %s14, 0
      %p69 = por %p67, %p68
      %p70 = scmp.ne.s32.totalorder %s62, %s64
      %p71 = scmp.eq.s32.totalorder %s19, 1
      %p72 = por %p70, %p71
      %p73 = scmp.ne.s32.totalorder %s64, %s65
      %p74 = scmp.eq.s32.totalorder %s19, 0
      %p75 = por %p73, %p74
      %p76 = scmp.ne.s32.totalorder %s64, %s65
      %p77 = scmp.eq.s32.totalorder %s20, 1
      %p78 = por %p76, %p77
      %p80 = scmp.ne.s32.totalorder %s65, %s79
      %p81 = scmp.eq.s32.totalorder %s20, 0
      %p82 = por %p80, %p81
      %s84 = sadd.s32 %s83, 1
      %p87 = scmp.eq.s32.totalorder %s14, 1
      %p88 = scmp.ne.s32.totalorder %s83, %s85
      %p89 = scmp.eq.s32.totalorder %s14, 0
      %p90 = por %p88, %p89
      %p91 = scmp.ne.s32.totalorder %s83, %s85
      %p92 = scmp.eq.s32.totalorder %s19, 1
      %p93 = por %p91, %p92
      %p94 = scmp.ne.s32.totalorder %s85, %s86
      %p95 = scmp.eq.s32.totalorder %s19, 0
      %p96 = por %p94, %p95
      %p97 = scmp.ne.s32.totalorder %s85, %s86
      %p98 = scmp.eq.s32.totalorder %s20, 1
      %p99 = por %p97, %p98
      %p101 = scmp.ne.s32.totalorder %s86, %s100
      %p102 = scmp.eq.s32.totalorder %s20, 0
      %p103 = por %p101, %p102
      %s105 = sadd.s32 %s104, 1
      %p108 = scmp.eq.s32.totalorder %s14, 1
      %p109 = scmp.ne.s32.totalorder %s104, %s106
      %p110 = scmp.eq.s32.totalorder %s14, 0
      %p111 = por %p109, %p110
      %p112 = scmp.ne.s32.totalorder %s104, %s106
      %p113 = scmp.eq.s32.totalorder %s19, 1
      %p114 = por %p112, %p113
      %p115 = scmp.ne.s32.totalorder %s106, %s107
      %p116 = scmp.eq.s32.totalorder %s19, 0
      %p117 = por %p115, %p116
      %p118 = scmp.ne.s32.totalorder %s106, %s107
      %p119 = scmp.eq.s32.totalorder %s20, 1
      %p120 = por %p118, %p119
      %p122 = scmp.ne.s32.totalorder %s107, %s121
      %p123 = scmp.eq.s32.totalorder %s20, 0
      %p124 = por %p122, %p123
      %s126 = sadd.s32 %s125, 1
      %p129 = scmp.eq.s32.totalorder %s14, 1
      %p130 = scmp.ne.s32.totalorder %s125, %s127
      %p131 = scmp.eq.s32.totalorder %s14, 0
      %p132 = por %p130, %p131
      %p133 = scmp.ne.s32.totalorder %s125, %s127
      %p134 = scmp.eq.s32.totalorder %s19, 1
      %p135 = por %p133, %p134
      %p136 = scmp.ne.s32.totalorder %s127, %s128
      %p137 = scmp.eq.s32.totalorder %s19, 0
      %p138 = por %p136, %p137
      %p139 = scmp.ne.s32.totalorder %s127, %s128
      %p140 = scmp.eq.s32.totalorder %s20, 1
      %p141 = por %p139, %p140
      %p143 = scmp.ne.s32.totalorder %s128, %s142
      %p144 = scmp.eq.s32.totalorder %s20, 0
      %p145 = por %p143, %p144
      %s146 = ssub.s32 %s21, %s33
      %s147 = ssub.s32 %s22, %s29
      %s148 = sor.u32 %s146, %s147
      %p149 = scmp.eq.s32.totalorder %s148, 0
      %s151 = sadd.s32 %s150, 1
      %s152 = scalar_select %p149, %s150, %s151
      %p155 = pneg %p149
      %p156 = scmp.eq.s32.totalorder %s14, 1
      %p157 = por %p155, %p156
      %p158 = scmp.ne.s32.totalorder %s150, %s153
      %p159 = scmp.eq.s32.totalorder %s14, 0
      %p160 = por %p158, %p159
      %p161 = scmp.ne.s32.totalorder %s150, %s153
      %p162 = scmp.eq.s32.totalorder %s19, 1
      %p163 = por %p161, %p162
      %p164 = scmp.ne.s32.totalorder %s153, %s154
      %p165 = scmp.eq.s32.totalorder %s19, 0
      %p166 = por %p164, %p165
      %p167 = scmp.ne.s32.totalorder %s153, %s154
      %p168 = scmp.eq.s32.totalorder %s20, 1
      %p169 = por %p167, %p168
      %p171 = scmp.ne.s32.totalorder %s154, %s170
      %p172 = scmp.eq.s32.totalorder %s20, 0
      %p173 = por %p171, %p172
      %p174 = scmp.le.s32.totalorder 1, %s14
      %p175 = scmp.lt.s32.totalorder %s14, 3
      %p176 = pnand %p174, %p175
      %p177 = pneg %p176
      // Predicated region
      $region9: #{tpu_custom_call.1} parent=5 // pred_check
        _
      $region10: #{tpu_custom_call.1} parent=5 // pred_check_branch
        %179 = sbr.rel (%p176) target = $region12
      $region11: #{tpu_custom_call.1} parent=5 // pred_region
        %s180 = ssub.s32 %s14, 1
        // Predicated region
        $region13: #{tpu_custom_call.1} parent=11 // pred_check
          %p181 = pneg %p75
        $region14: #{tpu_custom_call.1} parent=11 // pred_check_branch
          %183 = sbr.rel (%p181) target = $region16
        $region15: #{tpu_custom_call.1} parent=11 // pred_region
          _
        $region16: #{tpu_custom_call.1} parent=11 // pred_fallthru
          _
        // Predicated region
        $region17: #{tpu_custom_call.1} parent=11 // pred_check
          %p184 = pneg %p96
        $region18: #{tpu_custom_call.1} parent=11 // pred_check_branch
          %186 = sbr.rel (%p184) target = $region20
        $region19: #{tpu_custom_call.1} parent=11 // pred_region
          _
        $region20: #{tpu_custom_call.1} parent=11 // pred_fallthru
          _
        // Predicated region
        $region21: #{tpu_custom_call.1} parent=11 // pred_check
          %p187 = pneg %p117
        $region22: #{tpu_custom_call.1} parent=11 // pred_check_branch
          %189 = sbr.rel (%p187) target = $region24
        $region23: #{tpu_custom_call.1} parent=11 // pred_region
          _
        $region24: #{tpu_custom_call.1} parent=11 // pred_fallthru
          _
        // Predicated region
        $region25: #{tpu_custom_call.1} parent=11 // pred_check
          %p190 = pneg %p138
        $region26: #{tpu_custom_call.1} parent=11 // pred_check_branch
          %192 = sbr.rel (%p190) target = $region28
        $region27: #{tpu_custom_call.1} parent=11 // pred_region
          _
        $region28: #{tpu_custom_call.1} parent=11 // pred_fallthru
          _
      $region12: #{tpu_custom_call.1} parent=5 // pred_fallthru
        _
      %p193 = scmp.lt.s32.totalorder %s14, 2
      // Predicated region
      $region29: #{tpu_custom_call.1} parent=5 // pred_check
        %p194 = pneg %p193
      $region30: #{tpu_custom_call.1} parent=5 // pred_check_branch
        %196 = sbr.rel (%p194) target = $region32
      $region31: #{tpu_custom_call.1} parent=5 // pred_region
        // Predicated region
        $region33: #{tpu_custom_call.1} parent=31 // pred_check
          %p197 = pneg %p48
        $region34: #{tpu_custom_call.1} parent=31 // pred_check_branch
          %199 = sbr.rel (%p197) target = $region36
        $region35: #{tpu_custom_call.1} parent=31 // pred_region
          %s200 = smul.u32 2, %s22
          %p201 = scmp.lt.s32.totalorder %s21, 1
          %s202 = scalar_select %p201, %s21, 1
          %p203 = scmp.lt.s32.totalorder %s200, 1
          %s204 = scalar_select %p203, %s200, 1
          %s205 = smul.addr %s202, 16
          %s206 = sadd.s32 %s204, %s205
          %s207 = smul.addr %s206, 8
          %s208 = scalar_lea.vmem %s0, %s207
          %s209 = smul.u32 2, %s22
        $region36: #{tpu_custom_call.1} parent=31 // pred_fallthru
          _
      $region32: #{tpu_custom_call.1} parent=5 // pred_fallthru
        _
      %p210 = scmp.le.s32.totalorder 1, %s14
      %p211 = scmp.lt.s32.totalorder %s14, 3
      %p212 = pnand %p210, %p211
      %p213 = pneg %p212
      // Predicated region
      $region37: #{tpu_custom_call.1} parent=5 // pred_check
        _
      $region38: #{tpu_custom_call.1} parent=5 // pred_check_branch
        %215 = sbr.rel (%p212) target = $region40
      $region39: #{tpu_custom_call.1} parent=5 // pred_region
        %s216 = ssub.s32 %s14, 1
        %s217 = smul.u32 2, %s24
        %p218 = scmp.lt.s32.totalorder %s23, 1
        %s219 = scalar_select %p218, %s23, 1
        %p220 = scmp.lt.s32.totalorder %s217, 1
        %s221 = scalar_select %p220, %s217, 1
        %s222 = smul.addr %s219, 16
        %s223 = sadd.s32 %s221, %s222
        %s224 = smul.addr %s223, 8
        %s225 = scalar_lea.vmem %s0, %s224
        %p226 = pneg %p54
        %p227 = pneg %p51
        %p228 = pneg %p75
        %p229 = pneg %p72
        %p230 = pneg %p96
        %p231 = pneg %p93
        %p232 = pneg %p117
        %p233 = pneg %p114
        %p234 = pneg %p138
        %p235 = pneg %p135
        %p236 = pneg %p166
        %p237 = pneg %p163
        %s238 = sand.u32 %s153, 1
        %s239 = scalar_lea.sflag [#allocation3], %s238
        %s240 = sand.u32 %s153, 1
        %s241 = smul.addr %s240, 32
        %s242 = scalar_lea.vmem [#allocation2], %s241
        %s243 = smul.u32 2, %s24
        %p244 = scmp.lt.s32.totalorder %s23, 1
        %s245 = scalar_select %p244, %s23, 1
        %p246 = scmp.lt.s32.totalorder %s243, 1
        %s247 = scalar_select %p246, %s243, 1
        %s248 = smul.addr %s245, 16
        %s249 = sadd.s32 %s247, %s248
        %s250 = smul.addr %s249, 8
        %s251 = scalar_lea.vmem %s0, %s250
        %s252 = smul.u32 2, %s24
        %s253 = smul.u32 2, %s24
        %v255 = vld [vmem:[%s251] sm:$0xff]
        %v256 = vld [vmem:[%s251 + $0x8] sm:$0xff]
        %v257 = vld [vmem:[%s251 + $0x10] sm:$0xff]
        %v258 = vld [vmem:[%s251 + $0x18] sm:$0xff]
        %v259 = vld [vmem:[%s251 + $0x20] sm:$0xff]
        %v260 = vld [vmem:[%s251 + $0x28] sm:$0xff]
        %v261 = vld [vmem:[%s251 + $0x30] sm:$0xff]
        %v262 = vld [vmem:[%s251 + $0x38] sm:$0xff]
        %v263 = vld [vmem:[%s251 + $0x40] sm:$0xff]
        %v264 = vld [vmem:[%s251 + $0x48] sm:$0xff]
        %v265 = vld [vmem:[%s251 + $0x50] sm:$0xff]
        %v266 = vld [vmem:[%s251 + $0x58] sm:$0xff]
        %v267 = vld [vmem:[%s251 + $0x60] sm:$0xff]
        %v268 = vld [vmem:[%s251 + $0x68] sm:$0xff]
        %v269 = vld [vmem:[%s251 + $0x70] sm:$0xff]
        %v270 = vld [vmem:[%s251 + $0x78] sm:$0xff]
        %v271 = vpack.c.bf16 %v257, %v255
        %v272 = vpack.c.bf16 %v258, %v256
        %v273 = vpack.c.bf16 %v261, %v259
        %v274 = vpack.c.bf16 %v262, %v260
        %v275 = vpack.c.bf16 %v265, %v263
        %v276 = vpack.c.bf16 %v266, %v264
        %v277 = vpack.c.bf16 %v269, %v267
        %v278 = vpack.c.bf16 %v270, %v268
        %v279 = vld [vmem:[%s1] sm:$0xf]
        %v280 = vld [vmem:[%s1 + $0x4] sm:$0xf]
        %v281 = vld [vmem:[%s1 + $0x8] sm:$0xf]
        %v282 = vld [vmem:[%s1 + $0xc] sm:$0xf]
        %v283 = vld [vmem:[%s1 + $0x10] sm:$0xf]
        %v284 = vld [vmem:[%s1 + $0x14] sm:$0xf]
        %v285 = vld [vmem:[%s1 + $0x18] sm:$0xf]
        %v286 = vld [vmem:[%s1 + $0x1c] sm:$0xf]
        %v287 = vld [vmem:[%s1 + $0x20] sm:$0xf]
        %v288 = vld [vmem:[%s1 + $0x24] sm:$0xf]
        %v289 = vld [vmem:[%s1 + $0x28] sm:$0xf]
        %v290 = vld [vmem:[%s1 + $0x2c] sm:$0xf]
        %v291 = vld [vmem:[%s1 + $0x30] sm:$0xf]
        %v292 = vld [vmem:[%s1 + $0x34] sm:$0xf]
        %v293 = vld [vmem:[%s1 + $0x38] sm:$0xf]
        %v294 = vld [vmem:[%s1 + $0x3c] sm:$0xf]
        %v295 = vld [vmem:[%s1 + $0x40] sm:$0xf]
        %v296 = vld [vmem:[%s1 + $0x44] sm:$0xf]
        %v297 = vld [vmem:[%s1 + $0x48] sm:$0xf]
        %v298 = vld [vmem:[%s1 + $0x4c] sm:$0xf]
        %v299 = vld [vmem:[%s1 + $0x50] sm:$0xf]
        %v300 = vld [vmem:[%s1 + $0x54] sm:$0xf]
        %v301 = vld [vmem:[%s1 + $0x58] sm:$0xf]
        %v302 = vld [vmem:[%s1 + $0x5c] sm:$0xf]
        %v303 = vld [vmem:[%s1 + $0x60] sm:$0xf]
        %v304 = vld [vmem:[%s1 + $0x64] sm:$0xf]
        %v305 = vld [vmem:[%s1 + $0x68] sm:$0xf]
        %v306 = vld [vmem:[%s1 + $0x6c] sm:$0xf]
        %v307 = vld [vmem:[%s1 + $0x70] sm:$0xf]
        %v308 = vld [vmem:[%s1 + $0x74] sm:$0xf]
        %v309 = vld [vmem:[%s1 + $0x78] sm:$0xf]
        %v310 = vld [vmem:[%s1 + $0x7c] sm:$0xf]
        %v311 = vld [vmem:[%s1 + $0x80] sm:$0xf]
        %v312 = vld [vmem:[%s1 + $0x84] sm:$0xf]
        %v313 = vld [vmem:[%s1 + $0x88] sm:$0xf]
        %v314 = vld [vmem:[%s1 + $0x8c] sm:$0xf]
        %v315 = vld [vmem:[%s1 + $0x90] sm:$0xf]
        %v316 = vld [vmem:[%s1 + $0x94] sm:$0xf]
        %v317 = vld [vmem:[%s1 + $0x98] sm:$0xf]
        %v318 = vld [vmem:[%s1 + $0x9c] sm:$0xf]
        %v319 = vld [vmem:[%s1 + $0xa0] sm:$0xf]
        %v320 = vld [vmem:[%s1 + $0xa4] sm:$0xf]
        %v321 = vld [vmem:[%s1 + $0xa8] sm:$0xf]
        %v322 = vld [vmem:[%s1 + $0xac] sm:$0xf]
        %v323 = vld [vmem:[%s1 + $0xb0] sm:$0xf]
        %v324 = vld [vmem:[%s1 + $0xb4] sm:$0xf]
        %v325 = vld [vmem:[%s1 + $0xb8] sm:$0xf]
        %v326 = vld [vmem:[%s1 + $0xbc] sm:$0xf]
        %v327 = vld [vmem:[%s2] sm:$0xff]
        %v328 = vld [vmem:[%s2 + $0x8] sm:$0xff]
        %v329 = vld [vmem:[%s2 + $0x10] sm:$0xff]
        %v330 = vld [vmem:[%s2 + $0x18] sm:$0xff]
        %v331 = vld [vmem:[%s2 + $0x20] sm:$0xff]
        %v332 = vld [vmem:[%s2 + $0x28] sm:$0xff]
        %v333 = vld [vmem:[%s2 + $0x30] sm:$0xff]
        %v334 = vld [vmem:[%s2 + $0x38] sm:$0xff]
        %v335 = vld [vmem:[%s2 + $0x40] sm:$0xff]
        %v336 = vld [vmem:[%s2 + $0x48] sm:$0xff]
        %v337 = vld [vmem:[%s2 + $0x50] sm:$0xff]
        %v338 = vld [vmem:[%s2 + $0x58] sm:$0xff]
        %v339 = vld [vmem:[%s2 + $0x60] sm:$0xff]
        %v340 = vld [vmem:[%s2 + $0x68] sm:$0xff]
        %v341 = vld [vmem:[%s2 + $0x70] sm:$0xff]
        %v342 = vld [vmem:[%s2 + $0x78] sm:$0xff]
        %v343 = vld [vmem:[%s2 + $0x80] sm:$0xff]
        %v344 = vld [vmem:[%s2 + $0x88] sm:$0xff]
        %v345 = vld [vmem:[%s2 + $0x90] sm:$0xff]
        %v346 = vld [vmem:[%s2 + $0x98] sm:$0xff]
        %v347 = vld [vmem:[%s2 + $0xa0] sm:$0xff]
        %v348 = vld [vmem:[%s2 + $0xa8] sm:$0xff]
        %v349 = vld [vmem:[%s2 + $0xb0] sm:$0xff]
        %v350 = vld [vmem:[%s2 + $0xb8] sm:$0xff]
        %v351 = vld [vmem:[%s2 + $0xc0] sm:$0xff]
        %v352 = vld [vmem:[%s2 + $0xc8] sm:$0xff]
        %v353 = vld [vmem:[%s2 + $0xd0] sm:$0xff]
        %v354 = vld [vmem:[%s2 + $0xd8] sm:$0xff]
        %v355 = vld [vmem:[%s2 + $0xe0] sm:$0xff]
        %v356 = vld [vmem:[%s2 + $0xe8] sm:$0xff]
        %v357 = vld [vmem:[%s2 + $0xf0] sm:$0xff]
        %v358 = vld [vmem:[%s2 + $0xf8] sm:$0xff]
        %v359 = vld [vmem:[%s2 + $0x100] sm:$0xff]
        %v360 = vld [vmem:[%s2 + $0x108] sm:$0xff]
        %v361 = vld [vmem:[%s2 + $0x110] sm:$0xff]
        %v362 = vld [vmem:[%s2 + $0x118] sm:$0xff]
        %v363 = vld [vmem:[%s2 + $0x120] sm:$0xff]
        %v364 = vld [vmem:[%s2 + $0x128] sm:$0xff]
        %v365 = vld [vmem:[%s2 + $0x130] sm:$0xff]
        %v366 = vld [vmem:[%s2 + $0x138] sm:$0xff]
        %v367 = vld [vmem:[%s2 + $0x140] sm:$0xff]
        %v368 = vld [vmem:[%s2 + $0x148] sm:$0xff]
        %v369 = vld [vmem:[%s2 + $0x150] sm:$0xff]
        %v370 = vld [vmem:[%s2 + $0x158] sm:$0xff]
        %v371 = vld [vmem:[%s2 + $0x160] sm:$0xff]
        %v372 = vld [vmem:[%s2 + $0x168] sm:$0xff]
        %v373 = vld [vmem:[%s2 + $0x170] sm:$0xff]
        %v374 = vld [vmem:[%s2 + $0x178] sm:$0xff]
        %376 = vset.pattern.permute.xlu0 0
        %377 = vperm.xlu0 %376, %v327
        %v378 = vpop.permute.xlu0 %377
        %381 = vset.pattern.permute.xlu0 0
        %382 = vperm.xlu0 %381, %v328
        %v383 = vpop.permute.xlu0 %382
        %386 = vset.pattern.permute.xlu0 0
        %387 = vperm.xlu0 %386, %v329
        %v388 = vpop.permute.xlu0 %387
        %391 = vset.pattern.permute.xlu0 0
        %392 = vperm.xlu0 %391, %v330
        %v393 = vpop.permute.xlu0 %392
        %396 = vset.pattern.permute.xlu0 0
        %397 = vperm.xlu0 %396, %v331
        %v398 = vpop.permute.xlu0 %397
        %401 = vset.pattern.permute.xlu0 0
        %402 = vperm.xlu0 %401, %v332
        %v403 = vpop.permute.xlu0 %402
        %406 = vset.pattern.permute.xlu0 0
        %407 = vperm.xlu0 %406, %v333
        %v408 = vpop.permute.xlu0 %407
        %411 = vset.pattern.permute.xlu0 0
        %412 = vperm.xlu0 %411, %v334
        %v413 = vpop.permute.xlu0 %412
        %416 = vset.pattern.permute.xlu0 0
        %417 = vperm.xlu0 %416, %v335
        %v418 = vpop.permute.xlu0 %417
        %421 = vset.pattern.permute.xlu0 0
        %422 = vperm.xlu0 %421, %v336
        %v423 = vpop.permute.xlu0 %422
        %426 = vset.pattern.permute.xlu0 0
        %427 = vperm.xlu0 %426, %v337
        %v428 = vpop.permute.xlu0 %427
        %431 = vset.pattern.permute.xlu0 0
        %432 = vperm.xlu0 %431, %v338
        %v433 = vpop.permute.xlu0 %432
        %436 = vset.pattern.permute.xlu0 0
        %437 = vperm.xlu0 %436, %v339
        %v438 = vpop.permute.xlu0 %437
        %441 = vset.pattern.permute.xlu0 0
        %442 = vperm.xlu0 %441, %v340
        %v443 = vpop.permute.xlu0 %442
        %446 = vset.pattern.permute.xlu0 0
        %447 = vperm.xlu0 %446, %v341
        %v448 = vpop.permute.xlu0 %447
        %451 = vset.pattern.permute.xlu0 0
        %452 = vperm.xlu0 %451, %v342
        %v453 = vpop.permute.xlu0 %452
        %456 = vset.pattern.permute.xlu0 0
        %457 = vperm.xlu0 %456, %v343
        %v458 = vpop.permute.xlu0 %457
        %461 = vset.pattern.permute.xlu0 0
        %462 = vperm.xlu0 %461, %v344
        %v463 = vpop.permute.xlu0 %462
        %466 = vset.pattern.permute.xlu0 0
        %467 = vperm.xlu0 %466, %v345
        %v468 = vpop.permute.xlu0 %467
        %471 = vset.pattern.permute.xlu0 0
        %472 = vperm.xlu0 %471, %v346
        %v473 = vpop.permute.xlu0 %472
        %476 = vset.pattern.permute.xlu0 0
        %477 = vperm.xlu0 %476, %v347
        %v478 = vpop.permute.xlu0 %477
        %481 = vset.pattern.permute.xlu0 0
        %482 = vperm.xlu0 %481, %v348
        %v483 = vpop.permute.xlu0 %482
        %486 = vset.pattern.permute.xlu0 0
        %487 = vperm.xlu0 %486, %v349
        %v488 = vpop.permute.xlu0 %487
        %491 = vset.pattern.permute.xlu0 0
        %492 = vperm.xlu0 %491, %v350
        %v493 = vpop.permute.xlu0 %492
        %496 = vset.pattern.permute.xlu0 0
        %497 = vperm.xlu0 %496, %v351
        %v498 = vpop.permute.xlu0 %497
        %501 = vset.pattern.permute.xlu0 0
        %502 = vperm.xlu0 %501, %v352
        %v503 = vpop.permute.xlu0 %502
        %506 = vset.pattern.permute.xlu0 0
        %507 = vperm.xlu0 %506, %v353
        %v508 = vpop.permute.xlu0 %507
        %511 = vset.pattern.permute.xlu0 0
        %512 = vperm.xlu0 %511, %v354
        %v513 = vpop.permute.xlu0 %512
        %516 = vset.pattern.permute.xlu0 0
        %517 = vperm.xlu0 %516, %v355
        %v518 = vpop.permute.xlu0 %517
        %521 = vset.pattern.permute.xlu0 0
        %522 = vperm.xlu0 %521, %v356
        %v523 = vpop.permute.xlu0 %522
        %526 = vset.pattern.permute.xlu0 0
        %527 = vperm.xlu0 %526, %v357
        %v528 = vpop.permute.xlu0 %527
        %531 = vset.pattern.permute.xlu0 0
        %532 = vperm.xlu0 %531, %v358
        %v533 = vpop.permute.xlu0 %532
        %536 = vset.pattern.permute.xlu0 0
        %537 = vperm.xlu0 %536, %v359
        %v538 = vpop.permute.xlu0 %537
        %541 = vset.pattern.permute.xlu0 0
        %542 = vperm.xlu0 %541, %v360
        %v543 = vpop.permute.xlu0 %542
        %546 = vset.pattern.permute.xlu0 0
        %547 = vperm.xlu0 %546, %v361
        %v548 = vpop.permute.xlu0 %547
        %551 = vset.pattern.permute.xlu0 0
        %552 = vperm.xlu0 %551, %v362
        %v553 = vpop.permute.xlu0 %552
        %556 = vset.pattern.permute.xlu0 0
        %557 = vperm.xlu0 %556, %v363
        %v558 = vpop.permute.xlu0 %557
        %561 = vset.pattern.permute.xlu0 0
        %562 = vperm.xlu0 %561, %v364
        %v563 = vpop.permute.xlu0 %562
        %566 = vset.pattern.permute.xlu0 0
        %567 = vperm.xlu0 %566, %v365
        %v568 = vpop.permute.xlu0 %567
        %571 = vset.pattern.permute.xlu0 0
        %572 = vperm.xlu0 %571, %v366
        %v573 = vpop.permute.xlu0 %572
        %576 = vset.pattern.permute.xlu0 0
        %577 = vperm.xlu0 %576, %v367
        %v578 = vpop.permute.xlu0 %577
        %581 = vset.pattern.permute.xlu0 0
        %582 = vperm.xlu0 %581, %v368
        %v583 = vpop.permute.xlu0 %582
        %586 = vset.pattern.permute.xlu0 0
        %587 = vperm.xlu0 %586, %v369
        %v588 = vpop.permute.xlu0 %587
        %591 = vset.pattern.permute.xlu0 0
        %592 = vperm.xlu0 %591, %v370
        %v593 = vpop.permute.xlu0 %592
        %596 = vset.pattern.permute.xlu0 0
        %597 = vperm.xlu0 %596, %v371
        %v598 = vpop.permute.xlu0 %597
        %601 = vset.pattern.permute.xlu0 0
        %602 = vperm.xlu0 %601, %v372
        %v603 = vpop.permute.xlu0 %602
        %606 = vset.pattern.permute.xlu0 0
        %607 = vperm.xlu0 %606, %v373
        %v608 = vpop.permute.xlu0 %607
        %611 = vset.pattern.permute.xlu0 0
        %612 = vperm.xlu0 %611, %v374
        %v613 = vpop.permute.xlu0 %612
        %v663 = vunpack.c.l.b16 %v279
        %v664 = vunpack.c.l.b16 %v280
        %v665 = vunpack.c.l.b16 %v281
        %v666 = vunpack.c.l.b16 %v282
        %v667 = vunpack.c.l.b16 %v283
        %v668 = vunpack.c.l.b16 %v284
        %v669 = vunpack.c.l.b16 %v285
        %v670 = vunpack.c.l.b16 %v286
        %v671 = vunpack.c.l.b16 %v287
        %v672 = vunpack.c.l.b16 %v288
        %v673 = vunpack.c.l.b16 %v289
        %v674 = vunpack.c.l.b16 %v290
        %v675 = vunpack.c.l.b16 %v291
        %v676 = vunpack.c.l.b16 %v292
        %v677 = vunpack.c.l.b16 %v293
        %v678 = vunpack.c.l.b16 %v294
        %v679 = vunpack.c.l.b16 %v295
        %v680 = vunpack.c.l.b16 %v296
        %v681 = vunpack.c.l.b16 %v297
        %v682 = vunpack.c.l.b16 %v298
        %v683 = vunpack.c.l.b16 %v299
        %v684 = vunpack.c.l.b16 %v300
        %v685 = vunpack.c.l.b16 %v301
        %v686 = vunpack.c.l.b16 %v302
        %v687 = vunpack.c.l.b16 %v303
        %v688 = vunpack.c.l.b16 %v304
        %v689 = vunpack.c.l.b16 %v305
        %v690 = vunpack.c.l.b16 %v306
        %v691 = vunpack.c.l.b16 %v307
        %v692 = vunpack.c.l.b16 %v308
        %v693 = vunpack.c.l.b16 %v309
        %v694 = vunpack.c.l.b16 %v310
        %v695 = vunpack.c.l.b16 %v311
        %v696 = vunpack.c.l.b16 %v312
        %v697 = vunpack.c.l.b16 %v313
        %v698 = vunpack.c.l.b16 %v314
        %v699 = vunpack.c.l.b16 %v315
        %v700 = vunpack.c.l.b16 %v316
        %v701 = vunpack.c.l.b16 %v317
        %v702 = vunpack.c.l.b16 %v318
        %v703 = vunpack.c.l.b16 %v319
        %v704 = vunpack.c.l.b16 %v320
        %v705 = vunpack.c.l.b16 %v321
        %v706 = vunpack.c.l.b16 %v322
        %v707 = vunpack.c.l.b16 %v323
        %v708 = vunpack.c.l.b16 %v324
        %v709 = vunpack.c.l.b16 %v325
        %v710 = vunpack.c.l.b16 %v326
        %v711 = vpack.c.b16 %v664, %v663
        %v712 = vpack.c.b16 %v666, %v665
        %v713 = vpack.c.b16 %v668, %v667
        %v714 = vpack.c.b16 %v670, %v669
        %v715 = vpack.c.b16 %v672, %v671
        %v716 = vpack.c.b16 %v674, %v673
        %v717 = vpack.c.b16 %v676, %v675
        %v718 = vpack.c.b16 %v678, %v677
        %v719 = vpack.c.b16 %v680, %v679
        %v720 = vpack.c.b16 %v682, %v681
        %v721 = vpack.c.b16 %v684, %v683
        %v722 = vpack.c.b16 %v686, %v685
        %v723 = vpack.c.b16 %v688, %v687
        %v724 = vpack.c.b16 %v690, %v689
        %v725 = vpack.c.b16 %v692, %v691
        %v726 = vpack.c.b16 %v694, %v693
        %v727 = vpack.c.b16 %v696, %v695
        %v728 = vpack.c.b16 %v698, %v697
        %v729 = vpack.c.b16 %v700, %v699
        %v730 = vpack.c.b16 %v702, %v701
        %v731 = vpack.c.b16 %v704, %v703
        %v732 = vpack.c.b16 %v706, %v705
        %v733 = vpack.c.b16 %v708, %v707
        %v734 = vpack.c.b16 %v710, %v709
        %vm735 = vcmask 523264
        %v737 = vsel %vm735, %v711, 0
        %v740 = vsel %vm735, %v712, 0
        %v743 = vsel %vm735, %v713, 0
        %v746 = vsel %vm735, %v714, 0
        %v749 = vsel %vm735, %v715, 0
        %v752 = vsel %vm735, %v716, 0
        %v755 = vsel %vm735, %v717, 0
        %v758 = vsel %vm735, %v718, 0
        %v761 = vsel %vm735, %v719, 0
        %v764 = vsel %vm735, %v720, 0
        %v767 = vsel %vm735, %v721, 0
        %v770 = vsel %vm735, %v722, 0
        %v773 = vsel %vm735, %v723, 0
        %v776 = vsel %vm735, %v724, 0
        %v779 = vsel %vm735, %v725, 0
        %v782 = vsel %vm735, %v726, 0
        %v785 = vsel %vm735, %v727, 0
        %v788 = vsel %vm735, %v728, 0
        %v791 = vsel %vm735, %v729, 0
        %v794 = vsel %vm735, %v730, 0
        %v797 = vsel %vm735, %v731, 0
        %v800 = vsel %vm735, %v732, 0
        %v803 = vsel %vm735, %v733, 0
        %v806 = vsel %vm735, %v734, 0
        %808 = vmatprep.subr.bf16.mxu0 %v272
        %809 = vmatpush1.bf16.msra.mxu0 %v271
        %810 = vmatprep.subr.bf16.mxu0 %v274
        %811 = vmatpush1.bf16.msra.mxu0 %v273
        %812 = vmatprep.subr.bf16.mxu0 %v276
        %813 = vmatpush1.bf16.msra.mxu0 %v275
        %814 = vmatprep.subr.bf16.mxu0 %v278
        %815 = vmatpush1.bf16.msra.mxu0 %v277
        %816 = vmatprep.subr.bf16.mxu0 0
        %817 = vmatpush1.bf16.msra.mxu0 0
        %818 = vmatprep.subr.bf16.mxu0 0
        %819 = vmatpush1.bf16.msra.mxu0 0
        %820 = vmatprep.subr.bf16.mxu0 0
        %821 = vmatpush1.bf16.msra.mxu0 0
        %822 = vmatprep.subr.bf16.mxu0 0
        %823 = vmatpush1.bf16.msra.mxu0 0
        %824 = vmatprep.subr.bf16.mxu0 0
        %825 = vmatpush1.bf16.msra.mxu0 0
        %826 = vmatprep.subr.bf16.mxu0 0
        %827 = vmatpush1.bf16.msra.mxu0 0
        %828 = vmatprep.subr.bf16.mxu0 0
        %829 = vmatpush1.bf16.msra.mxu0 0
        %830 = vmatprep.subr.bf16.mxu0 0
        %831 = vmatpush1.bf16.msra.mxu0 0
        %832 = vmatprep.subr.bf16.mxu0 0
        %833 = vmatpush1.bf16.msra.mxu0 0
        %834 = vmatprep.subr.bf16.mxu0 0
        %835 = vmatpush1.bf16.msra.mxu0 0
        %836 = vmatprep.subr.bf16.mxu0 0
        %837 = vmatpush1.bf16.msra.mxu0 0
        %838 = vmatprep.subr.bf16.mxu0 0
        %839 = vmatpush1.bf16.msra.mxu0 0
        %840 = vmatprep.mubr.bf16.mxu0 0
        %841 = vmatmul.mubr.bf16.gmra.mrb[0].mxu0 %v737
        %v842 = vpop.f32.mrb[0].mxu0
        %v843 = vadd.f32 %v378, %v842
        %v844 = vpop.f32.mrb[0].mxu0
        %v845 = vadd.f32 %v378, %v844
        %v846 = vpop.f32.mrb[0].mxu0
        %v847 = vadd.f32 %v383, %v846
        %v848 = vpop.f32.mrb[0].mxu0
        %v849 = vadd.f32 %v383, %v848
        %850 = vmatprep.mubr.bf16.mxu0 0
        %851 = vmatmul.mubr.bf16.gmra.mrb[0].mxu0 %v740
        %v852 = vpop.f32.mrb[0].mxu0
        %v853 = vadd.f32 %v388, %v852
        %v854 = vpop.f32.mrb[0].mxu0
        %v855 = vadd.f32 %v388, %v854
        %v856 = vpop.f32.mrb[0].mxu0
        %v857 = vadd.f32 %v393, %v856
        %v858 = vpop.f32.mrb[0].mxu0
        %v859 = vadd.f32 %v393, %v858
        %860 = vmatprep.mubr.bf16.mxu0 0
        %861 = vmatmul.mubr.bf16.gmra.mrb[0].mxu0 %v743
        %v862 = vpop.f32.mrb[0].mxu0
        %v863 = vadd.f32 %v398, %v862
        %v864 = vpop.f32.mrb[0].mxu0
        %v865 = vadd.f32 %v398, %v864
        %v866 = vpop.f32.mrb[0].mxu0
        %v867 = vadd.f32 %v403, %v866
        %v868 = vpop.f32.mrb[0].mxu0
        %v869 = vadd.f32 %v403, %v868
        %870 = vmatprep.mubr.bf16.mxu0 0
        %871 = vmatmul.mubr.bf16.gmra.mrb[0].mxu0 %v746
        %v872 = vpop.f32.mrb[0].mxu0
        %v873 = vadd.f32 %v408, %v872
        %v874 = vpop.f32.mrb[0].mxu0
        %v875 = vadd.f32 %v408, %v874
        %v876 = vpop.f32.mrb[0].mxu0
        %v877 = vadd.f32 %v413, %v876
        %v878 = vpop.f32.mrb[0].mxu0
        %v879 = vadd.f32 %v413, %v878
        %880 = vmatprep.mubr.bf16.mxu0 0
        %881 = vmatmul.mubr.bf16.gmra.mrb[0].mxu0 %v749
        %v882 = vpop.f32.mrb[0].mxu0
        %v883 = vadd.f32 %v418, %v882
        %v884 = vpop.f32.mrb[0].mxu0
        %v885 = vadd.f32 %v418, %v884
        %v886 = vpop.f32.mrb[0].mxu0
        %v887 = vadd.f32 %v423, %v886
        %v888 = vpop.f32.mrb[0].mxu0
        %v889 = vadd.f32 %v423, %v888
        %890 = vmatprep.mubr.bf16.mxu0 0
        %891 = vmatmul.mubr.bf16.gmra.mrb[0].mxu0 %v752
        %v892 = vpop.f32.mrb[0].mxu0
        %v893 = vadd.f32 %v428, %v892
        %v894 = vpop.f32.mrb[0].mxu0
        %v895 = vadd.f32 %v428, %v894
        %v896 = vpop.f32.mrb[0].mxu0
        %v897 = vadd.f32 %v433, %v896
        %v898 = vpop.f32.mrb[0].mxu0
        %v899 = vadd.f32 %v433, %v898
        %900 = vmatprep.mubr.bf16.mxu0 0
        %901 = vmatmul.mubr.bf16.gmra.mrb[0].mxu0 %v755
        %v902 = vpop.f32.mrb[0].mxu0
        %v903 = vadd.f32 %v438, %v902
        %v904 = vpop.f32.mrb[0].mxu0
        %v905 = vadd.f32 %v438, %v904
        %v906 = vpop.f32.mrb[0].mxu0
        %v907 = vadd.f32 %v443, %v906
        %v908 = vpop.f32.mrb[0].mxu0
        %v909 = vadd.f32 %v443, %v908
        %910 = vmatprep.mubr.bf16.mxu0 0
        %911 = vmatmul.mubr.bf16.gmra.mrb[0].mxu0 %v758
        %v912 = vpop.f32.mrb[0].mxu0
        %v913 = vadd.f32 %v448, %v912
        %v914 = vpop.f32.mrb[0].mxu0
        %v915 = vadd.f32 %v448, %v914
        %v916 = vpop.f32.mrb[0].mxu0
        %v917 = vadd.f32 %v453, %v916
        %v918 = vpop.f32.mrb[0].mxu0
        %v919 = vadd.f32 %v453, %v918
        %920 = vmatprep.mubr.bf16.mxu0 0
        %921 = vmatmul.mubr.bf16.gmra.mrb[0].mxu0 %v761
        %v922 = vpop.f32.mrb[0].mxu0
        %v923 = vadd.f32 %v458, %v922
        %v924 = vpop.f32.mrb[0].mxu0
        %v925 = vadd.f32 %v458, %v924
        %v926 = vpop.f32.mrb[0].mxu0
        %v927 = vadd.f32 %v463, %v926
        %v928 = vpop.f32.mrb[0].mxu0
        %v929 = vadd.f32 %v463, %v928
        %930 = vmatprep.mubr.bf16.mxu0 0
        %931 = vmatmul.mubr.bf16.gmra.mrb[0].mxu0 %v764
        %v932 = vpop.f32.mrb[0].mxu0
        %v933 = vadd.f32 %v468, %v932
        %v934 = vpop.f32.mrb[0].mxu0
        %v935 = vadd.f32 %v468, %v934
        %v936 = vpop.f32.mrb[0].mxu0
        %v937 = vadd.f32 %v473, %v936
        %v938 = vpop.f32.mrb[0].mxu0
        %v939 = vadd.f32 %v473, %v938
        %940 = vmatprep.mubr.bf16.mxu0 0
        %941 = vmatmul.mubr.bf16.gmra.mrb[0].mxu0 %v767
        %v942 = vpop.f32.mrb[0].mxu0
        %v943 = vadd.f32 %v478, %v942
        %v944 = vpop.f32.mrb[0].mxu0
        %v945 = vadd.f32 %v478, %v944
        %v946 = vpop.f32.mrb[0].mxu0
        %v947 = vadd.f32 %v483, %v946
        %v948 = vpop.f32.mrb[0].mxu0
        %v949 = vadd.f32 %v483, %v948
        %950 = vmatprep.mubr.bf16.mxu0 0
        %951 = vmatmul.mubr.bf16.gmra.mrb[0].mxu0 %v770
        %v952 = vpop.f32.mrb[0].mxu0
        %v953 = vadd.f32 %v488, %v952
        %v954 = vpop.f32.mrb[0].mxu0
        %v955 = vadd.f32 %v488, %v954
        %v956 = vpop.f32.mrb[0].mxu0
        %v957 = vadd.f32 %v493, %v956
        %v958 = vpop.f32.mrb[0].mxu0
        %v959 = vadd.f32 %v493, %v958
        %960 = vmatprep.mubr.bf16.mxu0 0
        %961 = vmatmul.mubr.bf16.gmra.mrb[0].mxu0 %v773
        %v962 = vpop.f32.mrb[0].mxu0
        %v963 = vadd.f32 %v498, %v962
        %v964 = vpop.f32.mrb[0].mxu0
        %v965 = vadd.f32 %v498, %v964
        %v966 = vpop.f32.mrb[0].mxu0
        %v967 = vadd.f32 %v503, %v966
        %v968 = vpop.f32.mrb[0].mxu0
        %v969 = vadd.f32 %v503, %v968
        %970 = vmatprep.mubr.bf16.mxu0 0
        %971 = vmatmul.mubr.bf16.gmra.mrb[0].mxu0 %v776
        %v972 = vpop.f32.mrb[0].mxu0
        %v973 = vadd.f32 %v508, %v972
        %v974 = vpop.f32.mrb[0].mxu0
        %v975 = vadd.f32 %v508, %v974
        %v976 = vpop.f32.mrb[0].mxu0
        %v977 = vadd.f32 %v513, %v976
        %v978 = vpop.f32.mrb[0].mxu0
        %v979 = vadd.f32 %v513, %v978
        %980 = vmatprep.mubr.bf16.mxu0 0
        %981 = vmatmul.mubr.bf16.gmra.mrb[0].mxu0 %v779
        %v982 = vpop.f32.mrb[0].mxu0
        %v983 = vadd.f32 %v518, %v982
        %v984 = vpop.f32.mrb[0].mxu0
        %v985 = vadd.f32 %v518, %v984
        %v986 = vpop.f32.mrb[0].mxu0
        %v987 = vadd.f32 %v523, %v986
        %v988 = vpop.f32.mrb[0].mxu0
        %v989 = vadd.f32 %v523, %v988
        %990 = vmatprep.mubr.bf16.mxu0 0
        %991 = vmatmul.mubr.bf16.gmra.mrb[0].mxu0 %v782
        %v992 = vpop.f32.mrb[0].mxu0
        %v993 = vadd.f32 %v528, %v992
        %v994 = vpop.f32.mrb[0].mxu0
        %v995 = vadd.f32 %v528, %v994
        %v996 = vpop.f32.mrb[0].mxu0
        %v997 = vadd.f32 %v533, %v996
        %v998 = vpop.f32.mrb[0].mxu0
        %v999 = vadd.f32 %v533, %v998
        %1000 = vmatprep.mubr.bf16.mxu0 0
        %1001 = vmatmul.mubr.bf16.gmra.mrb[0].mxu0 %v785
        %v1002 = vpop.f32.mrb[0].mxu0
        %v1003 = vadd.f32 %v538, %v1002
        %v1004 = vpop.f32.mrb[0].mxu0
        %v1005 = vadd.f32 %v538, %v1004
        %v1006 = vpop.f32.mrb[0].mxu0
        %v1007 = vadd.f32 %v543, %v1006
        %v1008 = vpop.f32.mrb[0].mxu0
        %v1009 = vadd.f32 %v543, %v1008
        %1010 = vmatprep.mubr.bf16.mxu0 0
        %1011 = vmatmul.mubr.bf16.gmra.mrb[0].mxu0 %v788
        %v1012 = vpop.f32.mrb[0].mxu0
        %v1013 = vadd.f32 %v548, %v1012
        %v1014 = vpop.f32.mrb[0].mxu0
        %v1015 = vadd.f32 %v548, %v1014
        %v1016 = vpop.f32.mrb[0].mxu0
        %v1017 = vadd.f32 %v553, %v1016
        %v1018 = vpop.f32.mrb[0].mxu0
        %v1019 = vadd.f32 %v553, %v1018
        %1020 = vmatprep.mubr.bf16.mxu0 0
        %1021 = vmatmul.mubr.bf16.gmra.mrb[0].mxu0 %v791
        %v1022 = vpop.f32.mrb[0].mxu0
        %v1023 = vadd.f32 %v558, %v1022
        %v1024 = vpop.f32.mrb[0].mxu0
        %v1025 = vadd.f32 %v558, %v1024
        %v1026 = vpop.f32.mrb[0].mxu0
        %v1027 = vadd.f32 %v563, %v1026
        %v1028 = vpop.f32.mrb[0].mxu0
        %v1029 = vadd.f32 %v563, %v1028
        %1030 = vmatprep.mubr.bf16.mxu0 0
        %1031 = vmatmul.mubr.bf16.gmra.mrb[0].mxu0 %v794
        %v1032 = vpop.f32.mrb[0].mxu0
        %v1033 = vadd.f32 %v568, %v1032
        %v1034 = vpop.f32.mrb[0].mxu0
        %v1035 = vadd.f32 %v568, %v1034
        %v1036 = vpop.f32.mrb[0].mxu0
        %v1037 = vadd.f32 %v573, %v1036
        %v1038 = vpop.f32.mrb[0].mxu0
        %v1039 = vadd.f32 %v573, %v1038
        %1040 = vmatprep.mubr.bf16.mxu0 0
        %1041 = vmatmul.mubr.bf16.gmra.mrb[0].mxu0 %v797
        %v1042 = vpop.f32.mrb[0].mxu0
        %v1043 = vadd.f32 %v578, %v1042
        %v1044 = vpop.f32.mrb[0].mxu0
        %v1045 = vadd.f32 %v578, %v1044
        %v1046 = vpop.f32.mrb[0].mxu0
        %v1047 = vadd.f32 %v583, %v1046
        %v1048 = vpop.f32.mrb[0].mxu0
        %v1049 = vadd.f32 %v583, %v1048
        %1050 = vmatprep.mubr.bf16.mxu0 0
        %1051 = vmatmul.mubr.bf16.gmra.mrb[0].mxu0 %v800
        %v1052 = vpop.f32.mrb[0].mxu0
        %v1053 = vadd.f32 %v588, %v1052
        %v1054 = vpop.f32.mrb[0].mxu0
        %v1055 = vadd.f32 %v588, %v1054
        %v1056 = vpop.f32.mrb[0].mxu0
        %v1057 = vadd.f32 %v593, %v1056
        %v1058 = vpop.f32.mrb[0].mxu0
        %v1059 = vadd.f32 %v593, %v1058
        %1060 = vmatprep.mubr.bf16.mxu0 0
        %1061 = vmatmul.mubr.bf16.gmra.mrb[0].mxu0 %v803
        %v1062 = vpop.f32.mrb[0].mxu0
        %v1063 = vadd.f32 %v598, %v1062
        %v1064 = vpop.f32.mrb[0].mxu0
        %v1065 = vadd.f32 %v598, %v1064
        %v1066 = vpop.f32.mrb[0].mxu0
        %v1067 = vadd.f32 %v603, %v1066
        %v1068 = vpop.f32.mrb[0].mxu0
        %v1069 = vadd.f32 %v603, %v1068
        %1070 = vmatprep.mubr.bf16.mxu0 0
        %1071 = vmatmul.mubr.bf16.gmra.mrb[0].mxu0 %v806
        %v1072 = vpop.f32.mrb[0].mxu0
        %v1073 = vadd.f32 %v608, %v1072
        %v1074 = vpop.f32.mrb[0].mxu0
        %v1075 = vadd.f32 %v608, %v1074
        %v1076 = vpop.f32.mrb[0].mxu0
        %v1077 = vadd.f32 %v613, %v1076
        %v1078 = vpop.f32.mrb[0].mxu0
        %v1079 = vadd.f32 %v613, %v1078
        %1080 = vdwg.mxu0
        %v1081 = vmax.f32 %v843, 0.0
        %v1082 = vmax.f32 %v845, 0.0
        %v1083 = vmax.f32 %v847, 0.0
        %v1084 = vmax.f32 %v849, 0.0
        %v1085 = vmax.f32 %v853, 0.0
        %v1086 = vmax.f32 %v855, 0.0
        %v1087 = vmax.f32 %v857, 0.0
        %v1088 = vmax.f32 %v859, 0.0
        %v1089 = vmax.f32 %v863, 0.0
        %v1090 = vmax.f32 %v865, 0.0
        %v1091 = vmax.f32 %v867, 0.0
        %v1092 = vmax.f32 %v869, 0.0
        %v1093 = vmax.f32 %v873, 0.0
        %v1094 = vmax.f32 %v875, 0.0
        %v1095 = vmax.f32 %v877, 0.0
        %v1096 = vmax.f32 %v879, 0.0
        %v1097 = vmax.f32 %v883, 0.0
        %v1098 = vmax.f32 %v885, 0.0
        %v1099 = vmax.f32 %v887, 0.0
        %v1100 = vmax.f32 %v889, 0.0
        %v1101 = vmax.f32 %v893, 0.0
        %v1102 = vmax.f32 %v895, 0.0
        %v1103 = vmax.f32 %v897, 0.0
        %v1104 = vmax.f32 %v899, 0.0
        %v1105 = vmax.f32 %v903, 0.0
        %v1106 = vmax.f32 %v905, 0.0
        %v1107 = vmax.f32 %v907, 0.0
        %v1108 = vmax.f32 %v909, 0.0
        %v1109 = vmax.f32 %v913, 0.0
        %v1110 = vmax.f32 %v915, 0.0
        %v1111 = vmax.f32 %v917, 0.0
        %v1112 = vmax.f32 %v919, 0.0
        %v1113 = vmax.f32 %v923, 0.0
        %v1114 = vmax.f32 %v925, 0.0
        %v1115 = vmax.f32 %v927, 0.0
        %v1116 = vmax.f32 %v929, 0.0
        %v1117 = vmax.f32 %v933, 0.0
        %v1118 = vmax.f32 %v935, 0.0
        %v1119 = vmax.f32 %v937, 0.0
        %v1120 = vmax.f32 %v939, 0.0
        %v1121 = vmax.f32 %v943, 0.0
        %v1122 = vmax.f32 %v945, 0.0
        %v1123 = vmax.f32 %v947, 0.0
        %v1124 = vmax.f32 %v949, 0.0
        %v1125 = vmax.f32 %v953, 0.0
        %v1126 = vmax.f32 %v955, 0.0
        %v1127 = vmax.f32 %v957, 0.0
        %v1128 = vmax.f32 %v959, 0.0
        %v1129 = vmax.f32 %v963, 0.0
        %v1130 = vmax.f32 %v965, 0.0
        %v1131 = vmax.f32 %v967, 0.0
        %v1132 = vmax.f32 %v969, 0.0
        %v1133 = vmax.f32 %v973, 0.0
        %v1134 = vmax.f32 %v975, 0.0
        %v1135 = vmax.f32 %v977, 0.0
        %v1136 = vmax.f32 %v979, 0.0
        %v1137 = vmax.f32 %v983, 0.0
        %v1138 = vmax.f32 %v985, 0.0
        %v1139 = vmax.f32 %v987, 0.0
        %v1140 = vmax.f32 %v989, 0.0
        %v1141 = vmax.f32 %v993, 0.0
        %v1142 = vmax.f32 %v995, 0.0
        %v1143 = vmax.f32 %v997, 0.0
        %v1144 = vmax.f32 %v999, 0.0
        %v1145 = vmax.f32 %v1003, 0.0
        %v1146 = vmax.f32 %v1005, 0.0
        %v1147 = vmax.f32 %v1007, 0.0
        %v1148 = vmax.f32 %v1009, 0.0
        %v1149 = vmax.f32 %v1013, 0.0
        %v1150 = vmax.f32 %v1015, 0.0
        %v1151 = vmax.f32 %v1017, 0.0
        %v1152 = vmax.f32 %v1019, 0.0
        %v1153 = vmax.f32 %v1023, 0.0
        %v1154 = vmax.f32 %v1025, 0.0
        %v1155 = vmax.f32 %v1027, 0.0
        %v1156 = vmax.f32 %v1029, 0.0
        %v1157 = vmax.f32 %v1033, 0.0
        %v1158 = vmax.f32 %v1035, 0.0
        %v1159 = vmax.f32 %v1037, 0.0
        %v1160 = vmax.f32 %v1039, 0.0
        %v1161 = vmax.f32 %v1043, 0.0
        %v1162 = vmax.f32 %v1045, 0.0
        %v1163 = vmax.f32 %v1047, 0.0
        %v1164 = vmax.f32 %v1049, 0.0
        %v1165 = vmax.f32 %v1053, 0.0
        %v1166 = vmax.f32 %v1055, 0.0
        %v1167 = vmax.f32 %v1057, 0.0
        %v1168 = vmax.f32 %v1059, 0.0
        %v1169 = vmax.f32 %v1063, 0.0
        %v1170 = vmax.f32 %v1065, 0.0
        %v1171 = vmax.f32 %v1067, 0.0
        %v1172 = vmax.f32 %v1069, 0.0
        %v1173 = vmax.f32 %v1073, 0.0
        %v1174 = vmax.f32 %v1075, 0.0
        %v1175 = vmax.f32 %v1077, 0.0
        %v1176 = vmax.f32 %v1079, 0.0
        %v1177 = vpack.c.bf16 %v1083, %v1081
        %v1178 = vpack.c.bf16 %v1084, %v1082
        %v1179 = vpack.c.bf16 %v1087, %v1085
        %v1180 = vpack.c.bf16 %v1088, %v1086
        %v1181 = vpack.c.bf16 %v1091, %v1089
        %v1182 = vpack.c.bf16 %v1092, %v1090
        %v1183 = vpack.c.bf16 %v1095, %v1093
        %v1184 = vpack.c.bf16 %v1096, %v1094
        %v1185 = vpack.c.bf16 %v1099, %v1097
        %v1186 = vpack.c.bf16 %v1100, %v1098
        %v1187 = vpack.c.bf16 %v1103, %v1101
        %v1188 = vpack.c.bf16 %v1104, %v1102
        %v1189 = vpack.c.bf16 %v1107, %v1105
        %v1190 = vpack.c.bf16 %v1108, %v1106
        %v1191 = vpack.c.bf16 %v1111, %v1109
        %v1192 = vpack.c.bf16 %v1112, %v1110
        %v1193 = vpack.c.bf16 %v1115, %v1113
        %v1194 = vpack.c.bf16 %v1116, %v1114
        %v1195 = vpack.c.bf16 %v1119, %v1117
        %v1196 = vpack.c.bf16 %v1120, %v1118
        %v1197 = vpack.c.bf16 %v1123, %v1121
        %v1198 = vpack.c.bf16 %v1124, %v1122
        %v1199 = vpack.c.bf16 %v1127, %v1125
        %v1200 = vpack.c.bf16 %v1128, %v1126
        %v1201 = vpack.c.bf16 %v1131, %v1129
        %v1202 = vpack.c.bf16 %v1132, %v1130
        %v1203 = vpack.c.bf16 %v1135, %v1133
        %v1204 = vpack.c.bf16 %v1136, %v1134
        %v1205 = vpack.c.bf16 %v1139, %v1137
        %v1206 = vpack.c.bf16 %v1140, %v1138
        %v1207 = vpack.c.bf16 %v1143, %v1141
        %v1208 = vpack.c.bf16 %v1144, %v1142
        %v1209 = vpack.c.bf16 %v1147, %v1145
        %v1210 = vpack.c.bf16 %v1148, %v1146
        %v1211 = vpack.c.bf16 %v1151, %v1149
        %v1212 = vpack.c.bf16 %v1152, %v1150
        %v1213 = vpack.c.bf16 %v1155, %v1153
        %v1214 = vpack.c.bf16 %v1156, %v1154
        %v1215 = vpack.c.bf16 %v1159, %v1157
        %v1216 = vpack.c.bf16 %v1160, %v1158
        %v1217 = vpack.c.bf16 %v1163, %v1161
        %v1218 = vpack.c.bf16 %v1164, %v1162
        %v1219 = vpack.c.bf16 %v1167, %v1165
        %v1220 = vpack.c.bf16 %v1168, %v1166
        %v1221 = vpack.c.bf16 %v1171, %v1169
        %v1222 = vpack.c.bf16 %v1172, %v1170
        %v1223 = vpack.c.bf16 %v1175, %v1173
        %v1224 = vpack.c.bf16 %v1176, %v1174
        %v1225 = vld [vmem:[%s3] sm:$0xff]
        %v1226 = vld [vmem:[%s3 + $0x8] sm:$0xf]
        %v1227 = vld [vmem:[%s3 + $0xc] sm:$0xff]
        %v1228 = vld [vmem:[%s3 + $0x14] sm:$0xf]
        %v1229 = vld [vmem:[%s4] sm:$0xff]
        %v1230 = vld [vmem:[%s4 + $0x8] sm:$0xff]
        %1232 = vset.pattern.permute.xlu0 0
        %1233 = vperm.xlu0 %1232, %v1229
        %v1234 = vpop.permute.xlu0 %1233
        %1237 = vset.pattern.permute.xlu0 0
        %1238 = vperm.xlu0 %1237, %v1230
        %v1239 = vpop.permute.xlu0 %1238
        %v1245 = vunpack.c.l.b16 %v1225
        %v1246 = vunpack.c.h.b16 %v1225
        %v1247 = vunpack.c.l.b16 %v1226
        %v1248 = vunpack.c.l.b16 %v1227
        %v1249 = vunpack.c.h.b16 %v1227
        %v1250 = vunpack.c.l.b16 %v1228
        %v1251 = vpack.c.b16 %v1248, %v1245
        %v1252 = vpack.c.b16 %v1249, %v1246
        %v1253 = vpack.c.b16 %v1250, %v1247
        %1257 = vmatprep.subr.bf16.mxu0 %v1178
        %1258 = vmatpush1.bf16.msra.mxu0 %v1177
        %1259 = vmatprep.subr.bf16.mxu0 %v1180
        %1260 = vmatpush1.bf16.msra.mxu0 %v1179
        %1261 = vmatprep.subr.bf16.mxu0 %v1182
        %1262 = vmatpush1.bf16.msra.mxu0 %v1181
        %1263 = vmatprep.subr.bf16.mxu0 %v1184
        %1264 = vmatpush1.bf16.msra.mxu0 %v1183
        %1265 = vmatprep.subr.bf16.mxu0 %v1186
        %1266 = vmatpush1.bf16.msra.mxu0 %v1185
        %1267 = vmatprep.subr.bf16.mxu0 %v1188
        %1268 = vmatpush1.bf16.msra.mxu0 %v1187
        %1269 = vmatprep.subr.bf16.mxu0 %v1190
        %1270 = vmatpush1.bf16.msra.mxu0 %v1189
        %1271 = vmatprep.subr.bf16.mxu0 %v1192
        %1272 = vmatpush1.bf16.msra.mxu0 %v1191
        %1273 = vmatprep.subr.bf16.mxu0 %v1194
        %1274 = vmatpush1.bf16.msra.mxu0 %v1193
        %1275 = vmatprep.subr.bf16.mxu0 %v1196
        %1276 = vmatpush1.bf16.msra.mxu0 %v1195
        %1277 = vmatprep.subr.bf16.mxu0 %v1198
        %1278 = vmatpush1.bf16.msra.mxu0 %v1197
        %1279 = vmatprep.subr.bf16.mxu0 %v1200
        %1280 = vmatpush1.bf16.msra.mxu0 %v1199
        %1281 = vmatprep.subr.bf16.mxu0 %v1202
        %1282 = vmatpush1.bf16.msra.mxu0 %v1201
        %1283 = vmatprep.subr.bf16.mxu0 %v1204
        %1284 = vmatpush1.bf16.msra.mxu0 %v1203
        %1285 = vmatprep.subr.bf16.mxu0 %v1206
        %1286 = vmatpush1.bf16.msra.mxu0 %v1205
        %1287 = vmatprep.subr.bf16.mxu0 %v1208
        %1288 = vmatpush1.bf16.msra.mxu0 %v1207
        %1289 = vmatprep.mubr.bf16.mxu0 %v1252
        %1290 = vmatmul.mubr.bf16.gmra.mrb[0].mxu0 %v1251
        %v1291 = vpop.f32.mrb[0].mxu0
        %v1292 = vadd.f32 %v1234, %v1291
        %v1293 = vpop.f32.mrb[0].mxu0
        %v1294 = vadd.f32 %v1234, %v1293
        %v1295 = vpop.f32.mrb[0].mxu0
        %v1296 = vadd.f32 %v1239, %v1295
        %v1297 = vpop.f32.mrb[0].mxu0
        %v1298 = vadd.f32 %v1239, %v1297
        %1299 = vdwg.mxu0
        %1300 = vmatprep.subr.bf16.mxu0 %v1210
        %1301 = vmatpush1.bf16.msra.mxu0 %v1209
        %1302 = vmatprep.subr.bf16.mxu0 %v1212
        %1303 = vmatpush1.bf16.msra.mxu0 %v1211
        %1304 = vmatprep.subr.bf16.mxu0 %v1214
        %1305 = vmatpush1.bf16.msra.mxu0 %v1213
        %1306 = vmatprep.subr.bf16.mxu0 %v1216
        %1307 = vmatpush1.bf16.msra.mxu0 %v1215
        %1308 = vmatprep.subr.bf16.mxu0 %v1218
        %1309 = vmatpush1.bf16.msra.mxu0 %v1217
        %1310 = vmatprep.subr.bf16.mxu0 %v1220
        %1311 = vmatpush1.bf16.msra.mxu0 %v1219
        %1312 = vmatprep.subr.bf16.mxu0 %v1222
        %1313 = vmatpush1.bf16.msra.mxu0 %v1221
        %1314 = vmatprep.subr.bf16.mxu0 %v1224
        %1315 = vmatpush1.bf16.msra.mxu0 %v1223
        %1316 = vmatprep.subr.bf16.mxu0 0
        %1317 = vmatpush1.bf16.msra.mxu0 0
        %1318 = vmatprep.subr.bf16.mxu0 0
        %1319 = vmatpush1.bf16.msra.mxu0 0
        %1320 = vmatprep.subr.bf16.mxu0 0
        %1321 = vmatpush1.bf16.msra.mxu0 0
        %1322 = vmatprep.subr.bf16.mxu0 0
        %1323 = vmatpush1.bf16.msra.mxu0 0
        %1324 = vmatprep.subr.bf16.mxu0 0
        %1325 = vmatpush1.bf16.msra.mxu0 0
        %1326 = vmatprep.subr.bf16.mxu0 0
        %1327 = vmatpush1.bf16.msra.mxu0 0
        %1328 = vmatprep.subr.bf16.mxu0 0
        %1329 = vmatpush1.bf16.msra.mxu0 0
        %1330 = vmatprep.subr.bf16.mxu0 0
        %1331 = vmatpush1.bf16.msra.mxu0 0
        %1332 = vmatprep.mubr.bf16.mxu0 0
        %1333 = vmatmul.mubr.bf16.gmra.mrb[0].mxu0 %v1253
        %v1334 = vpop.f32.mrb[0].mxu0
        %v1335 = vadd.f32 %v1292, %v1334
        %v1336 = vpop.f32.mrb[0].mxu0
        %v1337 = vadd.f32 %v1294, %v1336
        %v1338 = vpop.f32.mrb[0].mxu0
        %v1339 = vadd.f32 %v1296, %v1338
        %v1340 = vpop.f32.mrb[0].mxu0
        %v1341 = vadd.f32 %v1298, %v1340
        %1342 = vdwg.mxu0
        %v1343 = vlaneseq
        %v1344 = vshrl.u32 %v1343, 7
        %v1345 = vadd.s32 %v1344, 8
        %vm1346 = vcmp.ge.s32.totalorder %v1344, 0
        %vm1347 = vcmp.ge.s32.totalorder %v1345, 0
        %vm1348 = vcmp.lt.s32.totalorder %v1344, 2
        %vm1349 = vcmp.lt.s32.totalorder %v1345, 2
        %vm1350 = vmand %vm1346, %vm1348
        %vm1351 = vmand %vm1347, %vm1349
        %vm1352 = vcmp.ge.s32.totalorder %v1344, 2
        %vm1353 = vcmp.ge.s32.totalorder %v1345, 2
        %vm1354 = vcmp.lt.s32.totalorder %v1344, 4
        %vm1355 = vcmp.lt.s32.totalorder %v1345, 4
        %vm1356 = vmand %vm1352, %vm1354
        %vm1357 = vmand %vm1353, %vm1355
        %vm1358 = vcmp.ge.s32.totalorder %v1344, 7
        %vm1359 = vcmp.ge.s32.totalorder %v1345, 7
        %vm1360 = vcmp.lt.s32.totalorder %v1344, 9
        %vm1361 = vcmp.lt.s32.totalorder %v1345, 9
        %vm1362 = vmand %vm1358, %vm1360
        %vm1363 = vmand %vm1359, %vm1361
        %vm1364 = vmor %vm1350, %vm1356
        %vm1365 = vmor %vm1351, %vm1357
        %vm1366 = vmor %vm1364, %vm1362
        %vm1367 = vmor %vm1365, %vm1363
        %v1368 = vxor.u32 %v1335, 2147483648
        %v1369 = vxor.u32 %v1337, 2147483648
        %v1370 = vxor.u32 %v1339, 2147483648
        %v1371 = vxor.u32 %v1341, 2147483648
        %v1372 = vmul.f32 %v1368, 1.442695
        %v1373 = vpow.pop %v1372
        %v1374 = vmul.f32 %v1369, 1.442695
        %v1375 = vpow.pop %v1374
        %v1376 = vmul.f32 %v1370, 1.442695
        %v1377 = vpow.pop %v1376
        %v1378 = vmul.f32 %v1371, 1.442695
        %v1379 = vpow.pop %v1378
        %v1380 = vadd.f32 %v1373, 1.0
        %v1381 = vadd.f32 %v1375, 1.0
        %v1382 = vadd.f32 %v1377, 1.0
        %v1383 = vadd.f32 %v1379, 1.0
        %v1384 = vrcp.pop %v1380
        %v1385 = vmul.f32 1.0, %v1384
        %v1386 = vrcp.pop %v1381
        %v1387 = vmul.f32 1.0, %v1386
        %v1388 = vrcp.pop %v1382
        %v1389 = vmul.f32 1.0, %v1388
        %v1390 = vrcp.pop %v1383
        %v1391 = vmul.f32 1.0, %v1390
        %v1392 = vsel %vm1366, %v1385, %v1335
        %v1393 = vsel %vm1366, %v1387, %v1337
        %v1394 = vsel %vm1367, %v1389, %v1339
        %v1395 = vsel %vm1367, %v1391, %v1341
        %1396 = vst [vmem:[%s242] sm:$0xff] %v1392
        %1397 = vst [vmem:[%s242 + $0x8] sm:$0xff] %v1393
        %1398 = vst [vmem:[%s242 + $0x10] sm:$0xff] %v1394
        %1399 = vst [vmem:[%s242 + $0x18] sm:$0xff] %v1395
        %s1400 = sand.u32 %s153, 1
        %s1401 = scalar_lea.sflag [#allocation3], %s1400
        %s1402 = sand.u32 %s153, 1
        %s1403 = smul.addr %s1402, 32
        %s1404 = scalar_lea.vmem [#allocation2], %s1403
        // Predicated region
        $region41: #{tpu_custom_call.1} parent=39 // pred_check
          %p1405 = pneg %p163
        $region42: #{tpu_custom_call.1} parent=39 // pred_check_branch
          %1407 = sbr.rel (%p1405) target = $region44
        $region43: #{tpu_custom_call.1} parent=39 // pred_region
          %s1408 = smul.u32 2, %s24
          %s1410 = ssub.s32 512, 512
          %1411 = vsyncadd %s1401, %s1410
          %s1412 = smul.addr %s23, 4
          %s1413 = sadd.s32 %s1408, %s1412
          %s1414 = smul.addr %s1413, 128
          %s1415 = scalar_lea.hbm %s5, %s1414
          %s1416 = sshll.u32 %s1404, 4
          %s1417 = int_to_ptr.vmem [resolvable:$true] %s1416
          %1422 = dma.vmem_to_hbm [thread:$0]  %s1417, 512, %s1415, %s1401, 256, 256, 16
        $region44: #{tpu_custom_call.1} parent=39 // pred_fallthru
          _
      $region40: #{tpu_custom_call.1} parent=5 // pred_fallthru
        _
      %p1423 = scmp.le.s32.totalorder 2, %s14
      // Predicated region
      $region45: #{tpu_custom_call.1} parent=5 // pred_check
        %p1424 = pneg %p1423
      $region46: #{tpu_custom_call.1} parent=5 // pred_check_branch
        %1426 = sbr.rel (%p1424) target = $region48
      $region47: #{tpu_custom_call.1} parent=5 // pred_region
        %s1427 = ssub.s32 %s14, 2
        // Predicated region
        $region49: #{tpu_custom_call.1} parent=47 // pred_check
          %p1428 = pneg %p169
        $region50: #{tpu_custom_call.1} parent=47 // pred_check_branch
          %1430 = sbr.rel (%p1428) target = $region52
        $region51: #{tpu_custom_call.1} parent=47 // pred_region
          %s1431 = sand.u32 %s154, 1
          %s1432 = scalar_lea.sflag [#allocation3], %s1431
          %s1433 = sand.u32 %s154, 1
          %s1434 = smul.addr %s1433, 32
          %s1435 = scalar_lea.vmem [#allocation2], %s1434
          %1436 = dma.done %s1432, 512
        $region52: #{tpu_custom_call.1} parent=47 // pred_fallthru
          _
      $region48: #{tpu_custom_call.1} parent=5 // pred_fallthru
        _
    $region6: #{tpu_custom_call.1} parent=1 // loop_footer
      %s18 = sadd.s32 1, %s14
    $region7: #{tpu_custom_call.1} parent=1 // loop_footer_branch
      %13 = sbr.rel target = $region3
    $region8: #{tpu_custom_call.1} parent=1 // loop_exit
      _
    %1437 = vsyncpa [#allocation3], 1
    %s1438 = scalar_lea.sflag [#allocation3], 1
    %1439 = vsyncpa %s1438, 1

</llo_original>
